<compile_context>
chip_gen: v5e
topology: v5e:2x2
jax: 0.10.0
libtpu: 0.0.40
codegen_flags: <defaults>
</compile_context>

<pallas_src>
import jax
import jax.numpy as jnp
from jax.experimental import pallas as pl
from jax.experimental.pallas import tpu as pltpu


def _round_up(x, m):
    return ((x + m - 1) // m) * m


def _vmem_capacity_bytes():
    """Physical VMEM per TensorCore; conservative 64 MiB fallback (v7x)."""
    try:
        return int(pltpu.get_tpu_info().vmem_capacity_bytes)
    except Exception:
        return 64 << 20


def _num_tensorcores():
    """v7x has 2 TensorCores per chip; v5e/v6e have 1."""
    try:
        if "v7" in jax.devices()[0].device_kind.lower():
            return 2
    except Exception:
        pass
    return 1


# ----------------------------- kernels ------------------------------------ #

def _ffn_kernel_direct(x_ref, w1_ref, b1_ref, w2_ref, b2_ref, o_ref):
    """f32 output: accumulate directly into the VMEM-resident output tile."""
    f = pl.program_id(1)
    # Partial hidden activations for this d_ff slice (f32 MXU accumulation);
    # bias + ReLU are elementwise over d_ff, so per-slice application is exact.
    h = jnp.dot(x_ref[...], w1_ref[...], preferred_element_type=jnp.float32)
    h = jnp.maximum(h + b1_ref[...], 0.0)
    contrib = jnp.dot(h.astype(w2_ref.dtype), w2_ref[...],
                      preferred_element_type=jnp.float32)

    @pl.when(f == 0)
    def _init():
        o_ref[...] = contrib + b2_ref[...]   # b2 added exactly once

    @pl.when(f != 0)
    def _accum():
        o_ref[...] += contrib


def _ffn_kernel_acc(x_ref, w1_ref, b1_ref, w2_ref, b2_ref, o_ref, acc_ref):
    """Narrow output dtypes: f32 scratch accumulator, single cast at finalize."""
    f = pl.program_id(1)

    @pl.when(f == 0)
    def _init():
        acc_ref[...] = jnp.zeros_like(acc_ref)

    h = jnp.dot(x_ref[...], w1_ref[...], preferred_element_type=jnp.float32)
    h = jnp.maximum(h + b1_ref[...], 0.0)
    acc_ref[...] += jnp.dot(h.astype(w2_ref.dtype), w2_ref[...],
                            preferred_element_type=jnp.float32)

    @pl.when(f == pl.num_programs(1) - 1)
    def _finalize():
        o_ref[...] = (acc_ref[...] + b2_ref[...]).astype(o_ref.dtype)


# ----------------------------- wrappers ------------------------------------ #

def prepare_ffn_params(w1, b1, w2, b2, *, compute_dtype=None, tf=512):
    """Pad + pre-transpose the FFN weights once (hoisted out of the per-call path).

    w1: (d_ff, d_model); b1: (d_ff,); w2: (d_model, d_ff); b2: (d_model,).
    compute_dtype: matmul-input dtype (bf16 recommended on v6e/v7x); MXU
    accumulation and the bias/ReLU epilogue stay f32.
    """
    d_ff, d_model = w1.shape
    cdt = jnp.dtype(compute_dtype) if compute_dtype is not None else jnp.dtype(w1.dtype)

    d_model_p = _round_up(d_model, 128)
    tf_eff = min(_round_up(tf, 128), _round_up(d_ff, 128))
    # Keep tf >= 256 where d_ff allows (full 256x256 MXU passes on v6e/v7x).
    if tf_eff < 256 and _round_up(d_ff, 128) >= 256:
        tf_eff = 256
    d_ff_p = _round_up(d_ff, tf_eff)

    w1_t = jnp.zeros((d_model_p, d_ff_p), cdt).at[:d_model, :d_ff].set(w1.T.astype(cdt))
    w2_t = jnp.zeros((d_ff_p, d_model_p), cdt).at[:d_ff, :d_model].set(w2.T.astype(cdt))
    b1_p = jnp.zeros((1, d_ff_p), jnp.float32).at[0, :d_ff].set(b1.astype(jnp.float32))
    b2_p = jnp.zeros((1, d_model_p), jnp.float32).at[0, :d_model].set(b2.astype(jnp.float32))

    return dict(w1_t=w1_t, b1_p=b1_p, w2_t=w2_t, b2_p=b2_p,
                d_model=d_model, d_ff=d_ff, d_model_p=d_model_p, d_ff_p=d_ff_p,
                tf=tf_eff, compute_dtype=cdt)


def feed_forward_pallas_prepared(x, params, *, tm=None):
    """y = relu(x @ W1^T + b1) @ W2^T + b2 using pre-padded/transposed params."""
    N, d_model = x.shape
    assert d_model == params["d_model"], "d_model mismatch vs prepared params"
    cdt = params["compute_dtype"]
    d_model_p, d_ff_p, tf_eff = params["d_model_p"], params["d_ff_p"], params["tf"]
    out_dtype = x.dtype
    need_acc = jnp.dtype(out_dtype) != jnp.dtype(jnp.float32)

    isz = jnp.dtype(cdt).itemsize
    osz = jnp.dtype(out_dtype).itemsize
    smult = {1: 32, 2: 16}.get(isz, 8)     # packed sublane multiple

    vmem_cap = _vmem_capacity_bytes()
    usable = vmem_cap - (8 << 20)          # compiler / internal-scratch headroom

    # Generation-aware default row tile: 1024 on 128 MiB chips, 512 on v7x.
    if tm is None:
        tm = 1024 if usable >= (88 << 20) else 512
    tm_eff = min(_round_up(tm, smult), _round_up(N, smult))

    # v7x: give both TensorCores a row tile for small-N / decode shapes.
    n_pad = _round_up(N, tm_eff)
    if _num_tensorcores() >= 2 and n_pad // tm_eff < 2:
        half = _round_up((n_pad + 1) // 2, smult)
        if smult <= half < tm_eff:
            tm_eff = half

    def vmem_need(tm_):
        x_b = 2 * tm_ * d_model_p * isz                               # x tile (2 bufs)
        w_b = 2 * (d_model_p * tf_eff + tf_eff * d_model_p) * isz     # W1^T + W2^T slices
        bias_b = 2 * (8 * tf_eff + 8 * d_model_p) * 4                 # sublane-padded biases
        out_b = 2 * tm_ * d_model_p * osz                             # output tile
        acc_b = tm_ * d_model_p * 4 if need_acc else 0                # f32 scratch (if any)
        h_b = tm_ * tf_eff * (4 + isz)                                # h (f32) + cast copy
        return x_b + w_b + bias_b + out_b + acc_b + h_b

    # Re-derive the row tile against this generation's VMEM (64 MiB on v7x).
    while vmem_need(tm_eff) > usable and tm_eff > smult:
        tm_eff = max(_round_up(tm_eff // 2, smult), smult)

    n_pad = _round_up(N, tm_eff)
    grid = (n_pad // tm_eff, d_ff_p // tf_eff)

    # Skip the activation copy when already aligned to the chosen tiling.
    if n_pad == N and d_model_p == d_model and jnp.dtype(x.dtype) == cdt:
        x_p = x
    else:
        x_p = jnp.zeros((n_pad, d_model_p), cdt).at[:N, :d_model].set(x.astype(cdt))

    # Never request more than physical VMEM (v7x is 64 MiB per TensorCore).
    vmem_limit = int(min(max(vmem_need(tm_eff) + (4 << 20), 32 << 20),
                         vmem_cap - (2 << 20)))

    row_tiles = grid[0]
    cost = pl.CostEstimate(
        flops=4 * N * d_model * params["d_ff"],
        transcendentals=0,
        bytes_accessed=int(
            n_pad * d_model_p * isz
            + row_tiles * (params["w1_t"].size + params["w2_t"].size) * isz  # weight re-streams
            + (params["b1_p"].size + params["b2_p"].size) * 4
            + n_pad * d_model_p * osz),
    )

    kernel = _ffn_kernel_acc if need_acc else _ffn_kernel_direct
    scratch = [pltpu.VMEM((tm_eff, d_model_p), jnp.float32)] if need_acc else []

    out = pl.pallas_call(
        kernel,
        out_shape=jax.ShapeDtypeStruct((n_pad, d_model_p), out_dtype),
        grid_spec=pltpu.PrefetchScalarGridSpec(
            num_scalar_prefetch=0,
            grid=grid,
            in_specs=[
                pl.BlockSpec((tm_eff, d_model_p), lambda i, f: (i, 0)),   # x row tile (reused over f)
                pl.BlockSpec((d_model_p, tf_eff), lambda i, f: (0, f)),   # W1^T d_ff slice
                pl.BlockSpec((1, tf_eff), lambda i, f: (0, f)),           # b1 slice
                pl.BlockSpec((tf_eff, d_model_p), lambda i, f: (f, 0)),   # W2^T d_ff slice
                pl.BlockSpec((1, d_model_p), lambda i, f: (0, 0)),        # b2 (resident, tiny)
            ],
            out_specs=pl.BlockSpec((tm_eff, d_model_p), lambda i, f: (i, 0)),
            scratch_shapes=scratch,
        ),
        compiler_params=pltpu.CompilerParams(
            dimension_semantics=("parallel", "arbitrary"),
            vmem_limit_bytes=vmem_limit,
        ),
        cost_estimate=cost,
    )(x_p, params["w1_t"], params["b1_p"], params["w2_t"], params["b2_p"])

    # Strip row / feature padding (padded rows hold relu(b1)@W2^T+b2 garbage).
    if n_pad == N and d_model_p == d_model:
        return out
    return out[:N, :d_model]


def feed_forward_pallas(x, w1, b1, w2, b2, *, tm=None, tf=512, compute_dtype=None):
    """One-shot convenience wrapper. For repeated calls, prepare the params once
    with prepare_ffn_params() and reuse them via feed_forward_pallas_prepared()
    to avoid re-padding/transposing the weights (a full extra HBM round trip)."""
    params = prepare_ffn_params(w1, b1, w2, b2, compute_dtype=compute_dtype, tf=tf)
    return feed_forward_pallas_prepared(x, params, tm=tm)


if __name__ == "__main__":
    # Small shapes consistent with a transformer feed-forward block.
    batch, seq = 2, 8
    d_model, d_ff = 32, 64

    key = jax.random.PRNGKey(0)
    kx, kw1, kb1, kw2, kb2 = jax.random.split(key, 5)

    # Deterministic parameter init (nn.Linear-style uniform bounds).
    bound1 = 1.0 / (d_model ** 0.5)
    bound2 = 1.0 / (d_ff ** 0.5)
    w1 = jax.random.uniform(kw1, (d_ff, d_model), jnp.float32, -bound1, bound1)
    b1 = jax.random.uniform(kb1, (d_ff,), jnp.float32, -bound1, bound1)
    w2 = jax.random.uniform(kw2, (d_model, d_ff), jnp.float32, -bound2, bound2)
    b2 = jax.random.uniform(kb2, (d_model,), jnp.float32, -bound2, bound2)

    x = jax.random.normal(kx, (batch, seq, d_model), jnp.float32)
    x2d = x.reshape(batch * seq, d_model)   # nn.Linear acts on the last dim

    # Reference in plain JAX (same math as the PyTorch module).
    ref = jnp.maximum(x2d @ w1.T + b1, 0.0) @ w2.T + b2

    # f32 path: prepare weights once, reuse across calls (hoisted layout work).
    params_f32 = prepare_ffn_params(w1, b1, w2, b2)
    y2d = feed_forward_pallas_prepared(x2d, params_f32)
    y2d = feed_forward_pallas_prepared(x2d, params_f32)   # reuse prepared params
    jax.block_until_ready(y2d)
    assert y2d.shape == (batch * seq, d_model)
    assert jnp.allclose(y2d, ref, atol=1e-4, rtol=1e-4), "f32 mismatch vs reference"

    # bf16 compute path (recommended on v6e/v7x): f32 accumulation, looser tol.
    params_bf16 = prepare_ffn_params(w1, b1, w2, b2, compute_dtype=jnp.bfloat16)
    y2d_bf16 = feed_forward_pallas_prepared(x2d, params_bf16)
    jax.block_until_ready(y2d_bf16)
    assert jnp.allclose(y2d_bf16, ref, atol=5e-2, rtol=5e-2), "bf16 mismatch vs reference"

    y = y2d.reshape(batch, seq, d_model)
    jax.block_until_ready(y)
    print("KERNEL_OK")
</pallas_src>

<mosaic_0001>
module attributes {stable_mosaic.version = 11 : i64} {
  func.func @_ffn_kernel_direct(%arg0: i32, %arg1: i32, %arg2: memref<16x128xf32, #tpu.memory_space<vmem>>, %arg3: memref<128x128xf32, #tpu.memory_space<vmem>>, %arg4: memref<1x128xf32, #tpu.memory_space<vmem>>, %arg5: memref<128x128xf32, #tpu.memory_space<vmem>>, %arg6: memref<1x128xf32, #tpu.memory_space<vmem>>, %arg7: memref<16x128xf32, #tpu.memory_space<vmem>>) attributes {dimension_semantics = [#tpu.dimension_semantics<parallel>, #tpu.dimension_semantics<arbitrary>], iteration_bounds = array<i64: 1, 1>, scalar_prefetch = 0 : i64, scratch_operands = 0 : i64, tpu.core_type = #tpu.core_type<tc>, window_params = [{transform_indices = @transform_0, window_bounds = array<i64: 16, 128>}, {transform_indices = @transform_1, window_bounds = array<i64: 128, 128>}, {transform_indices = @transform_2, window_bounds = array<i64: 1, 128>}, {transform_indices = @transform_3, window_bounds = array<i64: 128, 128>}, {pipeline_mode = #tpu.pipeline_mode<synchronous>, transform_indices = @transform_4, window_bounds = array<i64: 1, 128>}, {transform_indices = @transform_5, window_bounds = array<i64: 16, 128>}]} {
    %c0 = arith.constant 0 : index
    %c0_0 = arith.constant 0 : index
    %0 = vector.load %arg2[%c0, %c0_0] : memref<16x128xf32, #tpu.memory_space<vmem>>, vector<16x128xf32>
    %c0_1 = arith.constant 0 : index
    %c0_2 = arith.constant 0 : index
    %1 = vector.load %arg3[%c0_1, %c0_2] : memref<128x128xf32, #tpu.memory_space<vmem>>, vector<128x128xf32>
    %cst = arith.constant dense<0.000000e+00> : vector<16x128xf32>
    %2 = tpu.matmul %0, %1, %cst {dimension_numbers = #tpu.dot_dimension_numbers<[1], [0], [0], [1], [0, 0, 1, 1], [], []>} : vector<16x128xf32>, vector<128x128xf32>, vector<16x128xf32> -> vector<16x128xf32>
    %c0_3 = arith.constant 0 : index
    %c0_4 = arith.constant 0 : index
    %3 = vector.load %arg4[%c0_3, %c0_4] : memref<1x128xf32, #tpu.memory_space<vmem>>, vector<1x128xf32>
    %4 = vector.broadcast %3 : vector<1x128xf32> to vector<16x128xf32>
    %5 = arith.addf %2, %4 : vector<16x128xf32>
    %cst_5 = arith.constant 0.000000e+00 : f32
    %6 = vector.broadcast %cst_5 : f32 to vector<16x128xf32>
    %7 = arith.maximumf %5, %6 : vector<16x128xf32>
    %c0_6 = arith.constant 0 : index
    %c0_7 = arith.constant 0 : index
    %8 = vector.load %arg5[%c0_6, %c0_7] : memref<128x128xf32, #tpu.memory_space<vmem>>, vector<128x128xf32>
    %cst_8 = arith.constant dense<0.000000e+00> : vector<16x128xf32>
    %9 = tpu.matmul %7, %8, %cst_8 {dimension_numbers = #tpu.dot_dimension_numbers<[1], [0], [0], [1], [0, 0, 1, 1], [], []>} : vector<16x128xf32>, vector<128x128xf32>, vector<16x128xf32> -> vector<16x128xf32>
    %c0_i32 = arith.constant 0 : i32
    %10 = arith.cmpi eq, %arg1, %c0_i32 : i32
    %11 = arith.extui %10 : i1 to i32
    %c0_i32_9 = arith.constant 0 : i32
    %12 = arith.cmpi ne, %11, %c0_i32_9 : i32
    scf.if %12 {
      %c0_12 = arith.constant 0 : index
      %c0_13 = arith.constant 0 : index
      %16 = vector.load %arg6[%c0_12, %c0_13] : memref<1x128xf32, #tpu.memory_space<vmem>>, vector<1x128xf32>
      %17 = vector.broadcast %16 : vector<1x128xf32> to vector<16x128xf32>
      %18 = arith.addf %9, %17 : vector<16x128xf32>
      %c0_14 = arith.constant 0 : index
      %c0_15 = arith.constant 0 : index
      %19 = vector.load %arg7[%c0_14, %c0_15] : memref<16x128xf32, #tpu.memory_space<vmem>>, vector<16x128xf32>
      tpu.vector_store %arg7[%c0_14, %c0_15], %18 {strides = array<i32>} : memref<16x128xf32, #tpu.memory_space<vmem>>, vector<16x128xf32>,
    } else {
    }
    %c0_i32_10 = arith.constant 0 : i32
    %13 = arith.cmpi ne, %arg1, %c0_i32_10 : i32
    %14 = arith.extui %13 : i1 to i32
    %c0_i32_11 = arith.constant 0 : i32
    %15 = arith.cmpi ne, %14, %c0_i32_11 : i32
    scf.if %15 {
      %c0_12 = arith.constant 0 : index
      %c0_13 = arith.constant 0 : index
      %16 = vector.load %arg7[%c0_12, %c0_13] : memref<16x128xf32, #tpu.memory_space<vmem>>, vector<16x128xf32>
      %17 = arith.addf %16, %9 : vector<16x128xf32>
      %c0_14 = arith.constant 0 : index
      %c0_15 = arith.constant 0 : index
      %18 = vector.load %arg7[%c0_14, %c0_15] : memref<16x128xf32, #tpu.memory_space<vmem>>, vector<16x128xf32>
      tpu.vector_store %arg7[%c0_14, %c0_15], %17 {strides = array<i32>} : memref<16x128xf32, #tpu.memory_space<vmem>>, vector<16x128xf32>,
    } else {
    }
    return
  }
  func.func @transform_0(%arg0: i32, %arg1: i32) -> (i32, i32) {
    %c0_i32 = arith.constant 0 : i32
    %c0_i32_0 = arith.constant 0 : i32
    return %arg0, %c0_i32 : i32, i32
  }
  func.func @transform_1(%arg0: i32, %arg1: i32) -> (i32, i32) {
    %c0_i32 = arith.constant 0 : i32
    %c0_i32_0 = arith.constant 0 : i32
    return %c0_i32, %arg1 : i32, i32
  }
  func.func @transform_2(%arg0: i32, %arg1: i32) -> (i32, i32) {
    %c0_i32 = arith.constant 0 : i32
    %c0_i32_0 = arith.constant 0 : i32
    return %c0_i32, %arg1 : i32, i32
  }
  func.func @transform_3(%arg0: i32, %arg1: i32) -> (i32, i32) {
    %c0_i32 = arith.constant 0 : i32
    %c0_i32_0 = arith.constant 0 : i32
    return %arg1, %c0_i32 : i32, i32
  }
  func.func @transform_4(%arg0: i32, %arg1: i32) -> (i32, i32) {
    %c0_i32 = arith.constant 0 : i32
    %c0_i32_0 = arith.constant 0 : i32
    %c0_i32_1 = arith.constant 0 : i32
    return %c0_i32, %c0_i32_0 : i32, i32
  }
  func.func @transform_5(%arg0: i32, %arg1: i32) -> (i32, i32) {
    %c0_i32 = arith.constant 0 : i32
    %c0_i32_0 = arith.constant 0 : i32
    return %arg0, %c0_i32 : i32, i32
  }
}

</mosaic_0001>

<llo_original>
// kernel: tpu_custom_call.1
$region0: #{tpu_custom_call.1}
  #allocation0 [shape = 'u32[]', space=smem, size = 0x4, offset = 0x4, fixed_abs, tag = 'smem constant byte address 0x4 - core index']
  #allocation1 [shape = 'u32[72,128]{1,0:T(1,128)}', space=vmem, size = 0x9000, scoped, tag = 'internal scratch']
  %s0 = inlined_call_operand.hbm [shape: f32[16,128], index: 0, kind: input, shape index: {}]
  %s1 = inlined_call_operand.hbm [shape: f32[128,128], index: 1, kind: input, shape index: {}]
  %s2 = inlined_call_operand.vmem [shape: f32[1,128], index: 2, kind: input, shape index: {}]
  %s3 = inlined_call_operand.hbm [shape: f32[128,128], index: 3, kind: input, shape index: {}]
  %s4 = inlined_call_operand.vmem [shape: f32[1,128], index: 4, kind: input, shape index: {}]
  %s5 = inlined_call_operand.hbm [shape: f32[16,128], index: 5, kind: output, shape index: {}]
  %s6 = sld [smem:[#allocation0]]
  $region50: #{tpu_custom_call.1} parent=0
    _
  %s8 = ssub.s32 1, %s6
  %s9 = scalar_select 0, %s8, %s6
  $region1: #{tpu_custom_call.1} parent=0
    #allocation2 [shape = 'u8[8192]{0}', space=vmem, size = 0x2000, scoped, tag = 'input window, operand 0, single buffered']
    #allocation3 [shape = 's32[1]{0}', space=sflag, size = 0x4, scoped, tag = 'scoped memory for tpu_custom_call.1']
    #allocation4 [shape = 's32[1]{0}', space=sflag, size = 0x4, scoped, tag = 'scoped memory for tpu_custom_call.1']
    #allocation5 [shape = 'u8[65536]{0}', space=vmem, size = 0x10000, scoped, tag = 'input window, operand 1, single buffered']
    #allocation6 [shape = 's32[1]{0}', space=sflag, size = 0x4, scoped, tag = 'scoped memory for tpu_custom_call.1']
    #allocation7 [shape = 'u8[65536]{0}', space=vmem, size = 0x10000, scoped, tag = 'input window, operand 3, single buffered']
    #allocation8 [shape = 'u8[8192]{0}', space=vmem, size = 0x2000, scoped, tag = 'output window, operand 0, single buffered']
    %10 = vsyncpa [#allocation3], 0
    %11 = vsyncpa [#allocation6], 0
    %12 = vsyncpa [#allocation4], 0
    // Predicated region
    $region2: #{tpu_custom_call.1} parent=1 // pred_check
      _
    $region3: #{tpu_custom_call.1} parent=1 // pred_check_branch
      %14 = sbr.rel (0) target = $region5
    $region4: #{tpu_custom_call.1} parent=1 // pred_region
      %16 = vsyncadd [#allocation3], 0
      %s17 = sshll.u32 %s0, 4
      %s18 = int_to_ptr.hbm [resolvable:$true] %s17
      %s19 = sshll.u32 [#allocation2], 4
      %s20 = int_to_ptr.vmem [resolvable:$true] %s19
      %25 = dma.hbm_to_vmem [thread:$0]  %s18, 256, %s20, [#allocation3], 128, 128, 8
    $region5: #{tpu_custom_call.1} parent=1 // pred_fallthru
      _
    // Predicated region
    $region6: #{tpu_custom_call.1} parent=1 // pred_check
      _
    $region7: #{tpu_custom_call.1} parent=1 // pred_check_branch
      %27 = sbr.rel (0) target = $region9
    $region8: #{tpu_custom_call.1} parent=1 // pred_region
      %29 = vsyncadd [#allocation6], 0
      %s30 = sshll.u32 %s1, 4
      %s31 = int_to_ptr.hbm [resolvable:$true] %s30
      %s32 = sshll.u32 [#allocation5], 4
      %s33 = int_to_ptr.vmem [resolvable:$true] %s32
      %38 = dma.hbm_to_vmem [thread:$0]  %s31, 2048, %s33, [#allocation6], 128, 128, 8
    $region9: #{tpu_custom_call.1} parent=1 // pred_fallthru
      _
    // Predicated region
    $region10: #{tpu_custom_call.1} parent=1 // pred_check
      _
    $region11: #{tpu_custom_call.1} parent=1 // pred_check_branch
      %40 = sbr.rel (0) target = $region13
    $region12: #{tpu_custom_call.1} parent=1 // pred_region
      _
    $region13: #{tpu_custom_call.1} parent=1 // pred_fallthru
      _
    // Predicated region
    $region14: #{tpu_custom_call.1} parent=1 // pred_check
      _
    $region15: #{tpu_custom_call.1} parent=1 // pred_check_branch
      %42 = sbr.rel (0) target = $region17
    $region16: #{tpu_custom_call.1} parent=1 // pred_region
      %44 = vsyncadd [#allocation6], 0
      %s45 = sshll.u32 %s3, 4
      %s46 = int_to_ptr.hbm [resolvable:$true] %s45
      %s47 = sshll.u32 [#allocation7], 4
      %s48 = int_to_ptr.vmem [resolvable:$true] %s47
      %53 = dma.hbm_to_vmem [thread:$0]  %s46, 2048, %s48, [#allocation6], 128, 128, 8
    $region17: #{tpu_custom_call.1} parent=1 // pred_fallthru
      _
    // Predicated region
    $region18: #{tpu_custom_call.1} parent=1 // pred_check
      _
    $region19: #{tpu_custom_call.1} parent=1 // pred_check_branch
      %55 = sbr.rel (0) target = $region21
    $region20: #{tpu_custom_call.1} parent=1 // pred_region
      _
    $region21: #{tpu_custom_call.1} parent=1 // pred_fallthru
      _
    // Predicated region
    $region22: #{tpu_custom_call.1} parent=1 // pred_check
      _
    $region23: #{tpu_custom_call.1} parent=1 // pred_check_branch
      %57 = sbr.rel (0) target = $region25
    $region24: #{tpu_custom_call.1} parent=1 // pred_region
      %59 = dma.done [#allocation3], 256
    $region25: #{tpu_custom_call.1} parent=1 // pred_fallthru
      _
    // Predicated region
    $region26: #{tpu_custom_call.1} parent=1 // pred_check
      _
    $region27: #{tpu_custom_call.1} parent=1 // pred_check_branch
      %61 = sbr.rel (0) target = $region29
    $region28: #{tpu_custom_call.1} parent=1 // pred_region
      %63 = dma.done [#allocation6], 2048
    $region29: #{tpu_custom_call.1} parent=1 // pred_fallthru
      _
    // Predicated region
    $region30: #{tpu_custom_call.1} parent=1 // pred_check
      _
    $region31: #{tpu_custom_call.1} parent=1 // pred_check_branch
      %65 = sbr.rel (0) target = $region33
    $region32: #{tpu_custom_call.1} parent=1 // pred_region
      %67 = dma.done [#allocation6], 2048
    $region33: #{tpu_custom_call.1} parent=1 // pred_fallthru
      _
    %v68 = vld [vmem:[#allocation2] sm:$0xff]
    %v69 = vld [vmem:[#allocation2 + $0x8] sm:$0xff]
    %v70 = vld [vmem:[#allocation5] sm:$0xff]
    %v71 = vld [vmem:[#allocation5 + $0x8] sm:$0xff]
    %v72 = vld [vmem:[#allocation5 + $0x10] sm:$0xff]
    %v73 = vld [vmem:[#allocation5 + $0x18] sm:$0xff]
    %v74 = vld [vmem:[#allocation5 + $0x20] sm:$0xff]
    %v75 = vld [vmem:[#allocation5 + $0x28] sm:$0xff]
    %v76 = vld [vmem:[#allocation5 + $0x30] sm:$0xff]
    %v77 = vld [vmem:[#allocation5 + $0x38] sm:$0xff]
    %v78 = vld [vmem:[#allocation5 + $0x40] sm:$0xff]
    %v79 = vld [vmem:[#allocation5 + $0x48] sm:$0xff]
    %v80 = vld [vmem:[#allocation5 + $0x50] sm:$0xff]
    %v81 = vld [vmem:[#allocation5 + $0x58] sm:$0xff]
    %v82 = vld [vmem:[#allocation5 + $0x60] sm:$0xff]
    %v83 = vld [vmem:[#allocation5 + $0x68] sm:$0xff]
    %v84 = vld [vmem:[#allocation5 + $0x70] sm:$0xff]
    %v85 = vld [vmem:[#allocation5 + $0x78] sm:$0xff]
    %v86 = vld [vmem:[%s2] sm:$0x1]
    %v88 = vperm.slane %v86, 0
    %90 = vmatpush.msra.mxu0 %v85
    %91 = vmatpush.msra.mxu0 %v84
    %92 = vmatpush.msra.mxu0 %v83
    %93 = vmatpush.msra.mxu0 %v82
    %94 = vmatpush.msra.mxu0 %v81
    %95 = vmatpush.msra.mxu0 %v80
    %96 = vmatpush.msra.mxu0 %v79
    %97 = vmatpush.msra.mxu0 %v78
    %98 = vmatpush.msra.mxu0 %v77
    %99 = vmatpush.msra.mxu0 %v76
    %100 = vmatpush.msra.mxu0 %v75
    %101 = vmatpush.msra.mxu0 %v74
    %102 = vmatpush.msra.mxu0 %v73
    %103 = vmatpush.msra.mxu0 %v72
    %104 = vmatpush.msra.mxu0 %v71
    %105 = vmatpush.msra.mxu0 %v70
    %106 = vmatmul.f32.gmra.mxu0 %v68
    %v107 = vpop.f32.mrf.mxu0
    %v108 = vadd.f32 %v88, %v107
    %109 = vmatmul.f32.gmra.mxu0 %v69
    %v110 = vpop.f32.mrf.mxu0
    %v111 = vadd.f32 %v88, %v110
    %112 = vdwg.mxu0
    %v113 = vmax.f32 %v108, 0.0
    %v114 = vmax.f32 %v111, 0.0
    %v115 = vld [vmem:[#allocation7] sm:$0xff]
    %v116 = vld [vmem:[#allocation7 + $0x8] sm:$0xff]
    %v117 = vld [vmem:[#allocation7 + $0x10] sm:$0xff]
    %v118 = vld [vmem:[#allocation7 + $0x18] sm:$0xff]
    %v119 = vld [vmem:[#allocation7 + $0x20] sm:$0xff]
    %v120 = vld [vmem:[#allocation7 + $0x28] sm:$0xff]
    %v121 = vld [vmem:[#allocation7 + $0x30] sm:$0xff]
    %v122 = vld [vmem:[#allocation7 + $0x38] sm:$0xff]
    %v123 = vld [vmem:[#allocation7 + $0x40] sm:$0xff]
    %v124 = vld [vmem:[#allocation7 + $0x48] sm:$0xff]
    %v125 = vld [vmem:[#allocation7 + $0x50] sm:$0xff]
    %v126 = vld [vmem:[#allocation7 + $0x58] sm:$0xff]
    %v127 = vld [vmem:[#allocation7 + $0x60] sm:$0xff]
    %v128 = vld [vmem:[#allocation7 + $0x68] sm:$0xff]
    %v129 = vld [vmem:[#allocation7 + $0x70] sm:$0xff]
    %v130 = vld [vmem:[#allocation7 + $0x78] sm:$0xff]
    %131 = vmatpush.msra.mxu0 %v130
    %132 = vmatpush.msra.mxu0 %v129
    %133 = vmatpush.msra.mxu0 %v128
    %134 = vmatpush.msra.mxu0 %v127
    %135 = vmatpush.msra.mxu0 %v126
    %136 = vmatpush.msra.mxu0 %v125
    %137 = vmatpush.msra.mxu0 %v124
    %138 = vmatpush.msra.mxu0 %v123
    %139 = vmatpush.msra.mxu0 %v122
    %140 = vmatpush.msra.mxu0 %v121
    %141 = vmatpush.msra.mxu0 %v120
    %142 = vmatpush.msra.mxu0 %v119
    %143 = vmatpush.msra.mxu0 %v118
    %144 = vmatpush.msra.mxu0 %v117
    %145 = vmatpush.msra.mxu0 %v116
    %146 = vmatpush.msra.mxu0 %v115
    %147 = vmatmul.f32.gmra.mxu0 %v113
    %v148 = vpop.f32.mrf.mxu0
    %v149 = vadd.f32 0.0, %v148
    %150 = vmatmul.f32.gmra.mxu0 %v114
    %v151 = vpop.f32.mrf.mxu0
    %v152 = vadd.f32 0.0, %v151
    %153 = vdwg.mxu0
    %p154 = scmp.eq.s32.totalorder 0, 0
    // Predicated region
    $region34: #{tpu_custom_call.1} parent=1 // pred_check
      %p155 = pneg %p154
    $region35: #{tpu_custom_call.1} parent=1 // pred_check_branch
      %157 = sbr.rel (%p155) target = $region37
    $region36: #{tpu_custom_call.1} parent=1 // pred_region
      %v158 = vld [vmem:[%s4] sm:$0x1]
      %v160 = vperm.slane %v158, 0
      %v162 = vadd.f32 %v149, %v160
      %v163 = vadd.f32 %v152, %v160
      %164 = vst [vmem:[#allocation8] sm:$0xff] %v162
      %165 = vst [vmem:[#allocation8 + $0x8] sm:$0xff] %v163
    $region37: #{tpu_custom_call.1} parent=1 // pred_fallthru
      _
    %p166 = scmp.ne.s32.totalorder 0, 0
    // Predicated region
    $region38: #{tpu_custom_call.1} parent=1 // pred_check
      %p167 = pneg %p166
    $region39: #{tpu_custom_call.1} parent=1 // pred_check_branch
      %169 = sbr.rel (%p167) target = $region41
    $region40: #{tpu_custom_call.1} parent=1 // pred_region
      %v170 = vld [vmem:[#allocation8] sm:$0xff]
      %v171 = vld [vmem:[#allocation8 + $0x8] sm:$0xff]
      %v172 = vadd.f32 %v170, %v149
      %v173 = vadd.f32 %v171, %v152
      %174 = vst [vmem:[#allocation8] sm:$0xff] %v172
      %175 = vst [vmem:[#allocation8 + $0x8] sm:$0xff] %v173
    $region41: #{tpu_custom_call.1} parent=1 // pred_fallthru
      _
    // Predicated region
    $region42: #{tpu_custom_call.1} parent=1 // pred_check
      _
    $region43: #{tpu_custom_call.1} parent=1 // pred_check_branch
      %177 = sbr.rel (0) target = $region45
    $region44: #{tpu_custom_call.1} parent=1 // pred_region
      %179 = vsyncadd [#allocation4], 0
      %s180 = sshll.u32 [#allocation8], 4
      %s181 = int_to_ptr.vmem [resolvable:$true] %s180
      %s182 = sshll.u32 %s5, 4
      %s183 = int_to_ptr.hbm [resolvable:$true] %s182
      %188 = dma.vmem_to_hbm [thread:$0]  %s181, 256, %s183, [#allocation4], 128, 128, 8
    $region45: #{tpu_custom_call.1} parent=1 // pred_fallthru
      _
    // Predicated region
    $region46: #{tpu_custom_call.1} parent=1 // pred_check
      _
    $region47: #{tpu_custom_call.1} parent=1 // pred_check_branch
      %190 = sbr.rel (0) target = $region49
    $region48: #{tpu_custom_call.1} parent=1 // pred_region
      %192 = dma.done [#allocation4], 256
    $region49: #{tpu_custom_call.1} parent=1 // pred_fallthru
      _
    %193 = vsyncpa [#allocation3], 1
    %194 = vsyncpa [#allocation6], 1
    %195 = vsyncpa [#allocation4], 1

</llo_original>
